<compile_context>
chip_gen: v5e
topology: v5e:2x2
jax: 0.10.0
libtpu: 0.0.40
codegen_flags: <defaults>
</compile_context>

<pallas_src>
import functools

import jax
import jax.numpy as jnp
from jax.experimental import pallas as pl
from jax.experimental.pallas import tpu as pltpu

_BN_EPS = 1e-5
_H1 = 128
_SUBLANE = 8
_SINGLE_BLOCK_MAX_B = 4096   # whole batch in one VMEM block up to here
_TILE_B = 4096               # batch tile for the large-batch two-pass path

# NT matmul: contract dim 1 of lhs with dim 1 of rhs  ->  (lhs_rows, rhs_rows)
_TRANS_B_DIMS = (((1,), (1,)), ((), ()))


def _round_up(n, m):
    return ((n + m - 1) // m) * m


def _full_spec(shape):
    # Whole array as one VMEM block (same block for every grid step).
    return pl.BlockSpec(shape, lambda *_: (0,) * len(shape))


# --------------------------------------------------------------------------
# Kernels
# --------------------------------------------------------------------------
def _bpo_single_kernel(x_ref, w1_ref, b1_ref, gamma_ref, beta_ref,
                       w2_ref, b2_ref, whT_ref, bhT_ref, out_ref):
    """Whole batch in one block; BN batch stats computed in-kernel."""
    x = x_ref[...]
    n = x.shape[0]
    h1 = jnp.dot(x, w1_ref[...], preferred_element_type=jnp.float32) + b1_ref[...]

    inv_n = 1.0 / n
    mean = jnp.sum(h1, axis=0, keepdims=True) * inv_n
    # E[x^2]-E[x]^2 form: fine in f32 for roughly standardized activations.
    var = jnp.sum(h1 * h1, axis=0, keepdims=True) * inv_n - mean * mean
    scale = gamma_ref[...] * jax.lax.rsqrt(var + _BN_EPS)   # gamma folded in
    shift = beta_ref[...] - mean * scale
    h1 = jnp.maximum(h1 * scale + shift, 0.0)

    h2 = jnp.maximum(
        jnp.dot(h1, w2_ref[...], preferred_element_type=jnp.float32) + b2_ref[...],
        0.0)

    # Fused heads, transposed output: (out_pad, B) = whT (out_pad,64) @ h2^T.
    out_ref[...] = jax.lax.dot_general(
        whT_ref[...], h2, _TRANS_B_DIMS,
        preferred_element_type=jnp.float32) + bhT_ref[...]


def _bpo_stats_kernel(n_valid, tile_b, x_ref, w1_ref, b1_ref, stats_ref):
    """Pass 1: accumulate per-feature sum / sum-of-squares of h1 over B-tiles."""
    i = pl.program_id(0)

    @pl.when(i == 0)
    def _():
        stats_ref[...] = jnp.zeros_like(stats_ref)

    h1 = (jnp.dot(x_ref[...], w1_ref[...], preferred_element_type=jnp.float32)
          + b1_ref[...])

    def accum(h):
        # Single stacked (2,128) accumulator update (sum ; sum-of-squares).
        stats_ref[...] += jnp.concatenate(
            (jnp.sum(h, axis=0, keepdims=True),
             jnp.sum(h * h, axis=0, keepdims=True)), axis=0)

    if n_valid % tile_b != 0:   # static: only the last tile can hold OOB rows
        last = pl.num_programs(0) - 1

        @pl.when(i != last)
        def _():
            accum(h1)

        @pl.when(i == last)
        def _():
            # Mask out the garbage rows of the partial last tile.
            row = i * tile_b + jax.lax.broadcasted_iota(jnp.int32, h1.shape, 0)
            accum(jnp.where(row < n_valid, h1, 0.0))
    else:
        accum(h1)


def _bpo_mlp_kernel(x_ref, w1_ref, b1_ref, scale_ref, shift_ref,
                    w2_ref, b2_ref, whT_ref, bhT_ref, out_ref):
    """Pass 2: normalize with precomputed scale/shift + MLP + fused heads."""
    h1 = (jnp.dot(x_ref[...], w1_ref[...], preferred_element_type=jnp.float32)
          + b1_ref[...])
    h1 = jnp.maximum(h1 * scale_ref[...] + shift_ref[...], 0.0)
    h2 = jnp.maximum(
        jnp.dot(h1, w2_ref[...], preferred_element_type=jnp.float32) + b2_ref[...],
        0.0)
    # Garbage rows of a partial last tile only affect their own (discarded)
    # output lanes -- no row-crossing op after the stats pass.
    out_ref[...] = jax.lax.dot_general(
        whT_ref[...], h2, _TRANS_B_DIMS,
        preferred_element_type=jnp.float32) + bhT_ref[...]


# --------------------------------------------------------------------------
# Wrappers
# --------------------------------------------------------------------------
def pack_params(params):
    """Fuse the three heads once (outside jit) into a transposed, sublane-
    padded weight whT:(out_pad, 64) and bias bhT:(out_pad, 1)."""
    (w1, b1, gamma, beta, w2, b2, wf, bf, wp, bp, wc, bc) = params
    wh = jnp.concatenate((wf, wp, wc), axis=1)       # (64, out_dim)
    bh = jnp.concatenate((bf, bp, bc), axis=1)       # (1, out_dim)
    out_dim = wh.shape[1]
    out_pad = _round_up(out_dim, _SUBLANE)
    whT = jnp.pad(wh.T, ((0, out_pad - out_dim), (0, 0)))   # (out_pad, 64)
    bhT = jnp.pad(bh.T, ((0, out_pad - out_dim), (0, 0)))   # (out_pad, 1)
    packed = (w1, b1, gamma, beta, w2, b2, whT, bhT)
    return packed, out_dim


@functools.partial(jax.jit, static_argnames=("out_dim",))
def bpo_forward(x, packed, *, out_dim):
    (w1, b1, gamma, beta, w2, b2, whT, bhT) = packed
    B, in_dim = x.shape
    out_pad = whT.shape[0]

    if B <= _SINGLE_BLOCK_MAX_B:
        # Small/medium batch: one pallas_call, one block, no padding anywhere.
        args = (x, w1, b1, gamma, beta, w2, b2, whT, bhT)
        out = pl.pallas_call(
            _bpo_single_kernel,
            out_shape=jax.ShapeDtypeStruct((out_pad, B), jnp.float32),
            grid=(),
            in_specs=[_full_spec(a.shape) for a in args],
            out_specs=_full_spec((out_pad, B)),
        )(*args)
        return out[:out_dim, :].T

    # Large batch: two-pass BN, batch axis tiled with a cdiv grid (no padding).
    tile_b = _TILE_B
    nb = pl.cdiv(B, tile_b)

    stats = pl.pallas_call(
        functools.partial(_bpo_stats_kernel, B, tile_b),
        out_shape=jax.ShapeDtypeStruct((2, _H1), jnp.float32),
        grid=(nb,),
        in_specs=[
            pl.BlockSpec((tile_b, in_dim), lambda i: (i, 0)),
            _full_spec(w1.shape),
            _full_spec(b1.shape),
        ],
        out_specs=_full_spec((2, _H1)),
        compiler_params=pltpu.CompilerParams(
            dimension_semantics=("arbitrary",)),
    )(x, w1, b1)

    # Tiny (1,128) scale/shift computed once between the two passes.
    inv_n = 1.0 / B
    mean = stats[0:1, :] * inv_n
    var = stats[1:2, :] * inv_n - mean * mean
    scale = gamma * jax.lax.rsqrt(var + _BN_EPS)
    shift = beta - mean * scale

    # On v7x, switch "parallel" -> pltpu.CORE_PARALLEL to shard this axis
    # across the two TensorCores (kept generic here so it runs on v5e/v6e).
    out = pl.pallas_call(
        _bpo_mlp_kernel,
        out_shape=jax.ShapeDtypeStruct((out_pad, B), jnp.float32),
        grid=(nb,),
        in_specs=[
            pl.BlockSpec((tile_b, in_dim), lambda i: (i, 0)),
            _full_spec(w1.shape),
            _full_spec(b1.shape),
            _full_spec(scale.shape),
            _full_spec(shift.shape),
            _full_spec(w2.shape),
            _full_spec(b2.shape),
            _full_spec(whT.shape),
            _full_spec(bhT.shape),
        ],
        out_specs=pl.BlockSpec((out_pad, tile_b), lambda i: (0, i)),
        compiler_params=pltpu.CompilerParams(
            dimension_semantics=("parallel",)),
    )(x, w1, b1, scale, shift, w2, b2, whT, bhT)
    return out[:out_dim, :].T


def bpo_predict(x, packed, num_formations, num_types, num_choices):
    # Glue only: argmax slicing of the forward output (matches module.predict).
    # (If predict is the hot consumer, the three segment argmaxes could be
    #  fused into _bpo_mlp_kernel to avoid storing the logits at all.)
    out_dim = num_formations + num_types + num_choices
    out = bpo_forward(x, packed, out_dim=out_dim)
    formation = jnp.argmax(out[:, :num_formations], axis=1)
    playtype = jnp.argmax(out[:, num_formations:num_formations + num_types], axis=1)
    playchoice = jnp.argmax(out[:, num_formations + num_types:], axis=1)
    return formation, playtype, playchoice


def init_params(key, input_size, num_formations, num_types, num_choices):
    """Deterministic synthetic params (shapes mirror the PyTorch module)."""
    ks = jax.random.split(key, 10)

    def linear(kw, kb, fan_in, fan_out):
        bound = 1.0 / jnp.sqrt(jnp.asarray(fan_in, jnp.float32))
        w = jax.random.uniform(kw, (fan_in, fan_out), jnp.float32, -bound, bound)
        b = jax.random.uniform(kb, (1, fan_out), jnp.float32, -bound, bound)
        return w, b

    w1, b1 = linear(ks[0], ks[1], input_size, 128)
    gamma = jnp.ones((1, 128), jnp.float32)   # BatchNorm1d weight
    beta = jnp.zeros((1, 128), jnp.float32)   # BatchNorm1d bias
    w2, b2 = linear(ks[2], ks[3], 128, 64)
    wf, bf = linear(ks[4], ks[5], 64, num_formations)
    wp, bp = linear(ks[6], ks[7], 64, num_types)
    wc, bc = linear(ks[8], ks[9], 64, num_choices)
    return (w1, b1, gamma, beta, w2, b2, wf, bf, wp, bp, wc, bc)


def _reference_forward(x, params):
    # Pure-JAX reference for correctness checking (highest-precision matmuls).
    (w1, b1, gamma, beta, w2, b2, wf, bf, wp, bp, wc, bc) = params

    def mm(a, b):
        return jnp.dot(a, b, precision=jax.lax.Precision.HIGHEST)

    h1 = mm(x, w1) + b1
    mean = h1.mean(axis=0, keepdims=True)
    var = ((h1 - mean) ** 2).mean(axis=0, keepdims=True)
    h1 = (h1 - mean) / jnp.sqrt(var + _BN_EPS) * gamma + beta
    h1 = jnp.maximum(h1, 0.0)
    h2 = jnp.maximum(mm(h1, w2) + b2, 0.0)
    return jnp.concatenate((mm(h2, wf) + bf, mm(h2, wp) + bp, mm(h2, wc) + bc),
                           axis=1)


if __name__ == "__main__":
    input_size = 32
    num_formations = 5
    num_types = 3
    num_choices = 4
    out_dim = num_formations + num_types + num_choices

    key = jax.random.PRNGKey(0)
    kx, kp, kx2 = jax.random.split(key, 3)
    params = init_params(kp, input_size, num_formations, num_types, num_choices)
    packed, packed_out_dim = pack_params(params)
    assert packed_out_dim == out_dim

    # Small batch: single-block fast path (no padding, stats in-kernel).
    batch = 8
    x = jax.random.normal(kx, (batch, input_size), jnp.float32)
    out = bpo_forward(x, packed, out_dim=out_dim)
    jax.block_until_ready(out)
    ref = _reference_forward(x, params)
    assert out.shape == (batch, out_dim)
    assert jnp.allclose(out, ref, atol=1e-3, rtol=1e-3)

    formation, playtype, playchoice = bpo_predict(
        x, packed, num_formations, num_types, num_choices)
    jax.block_until_ready((formation, playtype, playchoice))

    # Large batch: two-pass BN, cdiv grid with a partial last tile (exercises
    # the last-tile row mask and the clipped transposed output writeback).
    big_batch = 5000
    xb = jax.random.normal(kx2, (big_batch, input_size), jnp.float32)
    out_b = bpo_forward(xb, packed, out_dim=out_dim)
    jax.block_until_ready(out_b)
    ref_b = _reference_forward(xb, params)
    assert out_b.shape == (big_batch, out_dim)
    assert jnp.allclose(out_b, ref_b, atol=1e-3, rtol=1e-3)

    print("KERNEL_OK")
</pallas_src>

<mosaic_0001>
module attributes {stable_mosaic.version = 11 : i64} {
  func.func @_bpo_single_kernel(%arg0: memref<8x32xf32, #tpu.memory_space<vmem>>, %arg1: memref<32x128xf32, #tpu.memory_space<vmem>>, %arg2: memref<1x128xf32, #tpu.memory_space<vmem>>, %arg3: memref<1x128xf32, #tpu.memory_space<vmem>>, %arg4: memref<1x128xf32, #tpu.memory_space<vmem>>, %arg5: memref<128x64xf32, #tpu.memory_space<vmem>>, %arg6: memref<1x64xf32, #tpu.memory_space<vmem>>, %arg7: memref<16x64xf32, #tpu.memory_space<vmem>>, %arg8: memref<16x1xf32, #tpu.memory_space<vmem>>, %arg9: memref<16x8xf32, #tpu.memory_space<vmem>>) attributes {dimension_semantics = [], scalar_prefetch = 0 : i64, scratch_operands = 0 : i64, tpu.core_type = #tpu.core_type<tc>} {
    %c0 = arith.constant 0 : index
    %c0_0 = arith.constant 0 : index
    %0 = vector.load %arg0[%c0, %c0_0] : memref<8x32xf32, #tpu.memory_space<vmem>>, vector<8x32xf32>
    %c0_1 = arith.constant 0 : index
    %c0_2 = arith.constant 0 : index
    %1 = vector.load %arg1[%c0_1, %c0_2] : memref<32x128xf32, #tpu.memory_space<vmem>>, vector<32x128xf32>
    %cst = arith.constant dense<0.000000e+00> : vector<8x128xf32>
    %2 = tpu.matmul %0, %1, %cst {dimension_numbers = #tpu.dot_dimension_numbers<[1], [0], [0], [1], [0, 0, 1, 1], [], []>} : vector<8x32xf32>, vector<32x128xf32>, vector<8x128xf32> -> vector<8x128xf32>
    %c0_3 = arith.constant 0 : index
    %c0_4 = arith.constant 0 : index
    %3 = vector.load %arg2[%c0_3, %c0_4] : memref<1x128xf32, #tpu.memory_space<vmem>>, vector<1x128xf32>
    %4 = vector.broadcast %3 : vector<1x128xf32> to vector<8x128xf32>
    %5 = arith.addf %2, %4 : vector<8x128xf32>
    %cst_5 = arith.constant dense<0.000000e+00> : vector<128xf32>
    %6 = vector.multi_reduction <add>, %5, %cst_5 [0] : vector<8x128xf32> to vector<128xf32>
    %7 = vector.shape_cast %6 : vector<128xf32> to vector<1x128xf32>
    %cst_6 = arith.constant 1.250000e-01 : f32
    %8 = vector.broadcast %cst_6 : f32 to vector<1x128xf32>
    %9 = arith.mulf %7, %8 : vector<1x128xf32>
    %10 = arith.mulf %5, %5 : vector<8x128xf32>
    %cst_7 = arith.constant dense<0.000000e+00> : vector<128xf32>
    %11 = vector.multi_reduction <add>, %10, %cst_7 [0] : vector<8x128xf32> to vector<128xf32>
    %12 = vector.shape_cast %11 : vector<128xf32> to vector<1x128xf32>
    %cst_8 = arith.constant 1.250000e-01 : f32
    %13 = vector.broadcast %cst_8 : f32 to vector<1x128xf32>
    %14 = arith.mulf %12, %13 : vector<1x128xf32>
    %15 = arith.mulf %9, %9 : vector<1x128xf32>
    %16 = arith.subf %14, %15 : vector<1x128xf32>
    %c0_9 = arith.constant 0 : index
    %c0_10 = arith.constant 0 : index
    %17 = vector.load %arg3[%c0_9, %c0_10] : memref<1x128xf32, #tpu.memory_space<vmem>>, vector<1x128xf32>
    %cst_11 = arith.constant 9.99999974E-6 : f32
    %18 = vector.broadcast %cst_11 : f32 to vector<1x128xf32>
    %19 = arith.addf %16, %18 : vector<1x128xf32>
    %20 = math.rsqrt %19 : vector<1x128xf32>
    %21 = arith.mulf %17, %20 : vector<1x128xf32>
    %c0_12 = arith.constant 0 : index
    %c0_13 = arith.constant 0 : index
    %22 = vector.load %arg4[%c0_12, %c0_13] : memref<1x128xf32, #tpu.memory_space<vmem>>, vector<1x128xf32>
    %23 = arith.mulf %9, %21 : vector<1x128xf32>
    %24 = arith.subf %22, %23 : vector<1x128xf32>
    %25 = vector.broadcast %21 : vector<1x128xf32> to vector<8x128xf32>
    %26 = arith.mulf %5, %25 : vector<8x128xf32>
    %27 = vector.broadcast %24 : vector<1x128xf32> to vector<8x128xf32>
    %28 = arith.addf %26, %27 : vector<8x128xf32>
    %cst_14 = arith.constant 0.000000e+00 : f32
    %29 = vector.broadcast %cst_14 : f32 to vector<8x128xf32>
    %30 = arith.maximumf %28, %29 : vector<8x128xf32>
    %c0_15 = arith.constant 0 : index
    %c0_16 = arith.constant 0 : index
    %31 = vector.load %arg5[%c0_15, %c0_16] : memref<128x64xf32, #tpu.memory_space<vmem>>, vector<128x64xf32>
    %cst_17 = arith.constant dense<0.000000e+00> : vector<8x64xf32>
    %32 = tpu.matmul %30, %31, %cst_17 {dimension_numbers = #tpu.dot_dimension_numbers<[1], [0], [0], [1], [0, 0, 1, 1], [], []>} : vector<8x128xf32>, vector<128x64xf32>, vector<8x64xf32> -> vector<8x64xf32>
    %c0_18 = arith.constant 0 : index
    %c0_19 = arith.constant 0 : index
    %33 = vector.load %arg6[%c0_18, %c0_19] : memref<1x64xf32, #tpu.memory_space<vmem>>, vector<1x64xf32>
    %34 = vector.broadcast %33 : vector<1x64xf32> to vector<8x64xf32>
    %35 = arith.addf %32, %34 : vector<8x64xf32>
    %cst_20 = arith.constant 0.000000e+00 : f32
    %36 = vector.broadcast %cst_20 : f32 to vector<8x64xf32>
    %37 = arith.maximumf %35, %36 : vector<8x64xf32>
    %c0_21 = arith.constant 0 : index
    %c0_22 = arith.constant 0 : index
    %38 = vector.load %arg7[%c0_21, %c0_22] : memref<16x64xf32, #tpu.memory_space<vmem>>, vector<16x64xf32>
    %cst_23 = arith.constant dense<0.000000e+00> : vector<16x8xf32>
    %39 = tpu.matmul %38, %37, %cst_23 {dimension_numbers = #tpu.dot_dimension_numbers<[1], [1], [0], [0], [0, 0, 1, 0], [], []>} : vector<16x64xf32>, vector<8x64xf32>, vector<16x8xf32> -> vector<16x8xf32>
    %c0_24 = arith.constant 0 : index
    %c0_25 = arith.constant 0 : index
    %40 = vector.load %arg8[%c0_24, %c0_25] : memref<16x1xf32, #tpu.memory_space<vmem>>, vector<16x1xf32>
    %41 = vector.broadcast %40 : vector<16x1xf32> to vector<16x8xf32>
    %42 = arith.addf %39, %41 : vector<16x8xf32>
    %c0_26 = arith.constant 0 : index
    %c0_27 = arith.constant 0 : index
    %43 = vector.load %arg9[%c0_26, %c0_27] : memref<16x8xf32, #tpu.memory_space<vmem>>, vector<16x8xf32>
    tpu.vector_store %arg9[%c0_26, %c0_27], %42 {strides = array<i32>} : memref<16x8xf32, #tpu.memory_space<vmem>>, vector<16x8xf32>,
    return
  }
}

</mosaic_0001>

<llo_original>
// kernel: bpo_forward.1
$region0: #{bpo_forward.1}
  #allocation0 [shape = 'u32[]', space=smem, size = 0x4, offset = 0x4, fixed_abs, tag = 'smem constant byte address 0x4 - core index']
  #allocation1 [shape = 'u32[72,128]{1,0:T(1,128)}', space=vmem, size = 0x9000, scoped, tag = 'internal scratch']
  %s0 = inlined_call_operand.vmem [shape: f32[8,32], index: 0, kind: input, shape index: {}]
  %s1 = inlined_call_operand.vmem [shape: f32[32,128], index: 1, kind: input, shape index: {}]
  %s2 = inlined_call_operand.vmem [shape: f32[1,128], index: 2, kind: input, shape index: {}]
  %s3 = inlined_call_operand.vmem [shape: f32[1,128], index: 3, kind: input, shape index: {}]
  %s4 = inlined_call_operand.vmem [shape: f32[1,128], index: 4, kind: input, shape index: {}]
  %s5 = inlined_call_operand.vmem [shape: f32[128,64], index: 5, kind: input, shape index: {}]
  %s6 = inlined_call_operand.vmem [shape: f32[1,64], index: 6, kind: input, shape index: {}]
  %s7 = inlined_call_operand.vmem [shape: f32[16,64], index: 7, kind: input, shape index: {}]
  %s8 = inlined_call_operand.vmem [shape: f32[16,1], index: 8, kind: input, shape index: {}]
  %s9 = inlined_call_operand.vmem [shape: f32[16,8], index: 9, kind: output, shape index: {}]
  %s10 = sld [smem:[#allocation0]]
  $region46: #{bpo_forward.1} parent=0
    _
  %s12 = ssub.s32 1, %s10
  %s13 = scalar_select 0, %s12, %s10
  // Predicated region
  $region2: #{bpo_forward.1} parent=0 // pred_check
    _
  $region3: #{bpo_forward.1} parent=0 // pred_check_branch
    %15 = sbr.rel (0) target = $region5
  $region4: #{bpo_forward.1} parent=0 // pred_region
    _
  $region5: #{bpo_forward.1} parent=0 // pred_fallthru
    _
  // Predicated region
  $region6: #{bpo_forward.1} parent=0 // pred_check
    _
  $region7: #{bpo_forward.1} parent=0 // pred_check_branch
    %17 = sbr.rel (0) target = $region9
  $region8: #{bpo_forward.1} parent=0 // pred_region
    _
  $region9: #{bpo_forward.1} parent=0 // pred_fallthru
    _
  // Predicated region
  $region10: #{bpo_forward.1} parent=0 // pred_check
    _
  $region11: #{bpo_forward.1} parent=0 // pred_check_branch
    %19 = sbr.rel (0) target = $region13
  $region12: #{bpo_forward.1} parent=0 // pred_region
    _
  $region13: #{bpo_forward.1} parent=0 // pred_fallthru
    _
  // Predicated region
  $region14: #{bpo_forward.1} parent=0 // pred_check
    _
  $region15: #{bpo_forward.1} parent=0 // pred_check_branch
    %21 = sbr.rel (0) target = $region17
  $region16: #{bpo_forward.1} parent=0 // pred_region
    _
  $region17: #{bpo_forward.1} parent=0 // pred_fallthru
    _
  // Predicated region
  $region18: #{bpo_forward.1} parent=0 // pred_check
    _
  $region19: #{bpo_forward.1} parent=0 // pred_check_branch
    %23 = sbr.rel (0) target = $region21
  $region20: #{bpo_forward.1} parent=0 // pred_region
    _
  $region21: #{bpo_forward.1} parent=0 // pred_fallthru
    _
  // Predicated region
  $region22: #{bpo_forward.1} parent=0 // pred_check
    _
  $region23: #{bpo_forward.1} parent=0 // pred_check_branch
    %25 = sbr.rel (0) target = $region25
  $region24: #{bpo_forward.1} parent=0 // pred_region
    _
  $region25: #{bpo_forward.1} parent=0 // pred_fallthru
    _
  // Predicated region
  $region26: #{bpo_forward.1} parent=0 // pred_check
    _
  $region27: #{bpo_forward.1} parent=0 // pred_check_branch
    %27 = sbr.rel (0) target = $region29
  $region28: #{bpo_forward.1} parent=0 // pred_region
    _
  $region29: #{bpo_forward.1} parent=0 // pred_fallthru
    _
  // Predicated region
  $region30: #{bpo_forward.1} parent=0 // pred_check
    _
  $region31: #{bpo_forward.1} parent=0 // pred_check_branch
    %29 = sbr.rel (0) target = $region33
  $region32: #{bpo_forward.1} parent=0 // pred_region
    _
  $region33: #{bpo_forward.1} parent=0 // pred_fallthru
    _
  // Predicated region
  $region34: #{bpo_forward.1} parent=0 // pred_check
    _
  $region35: #{bpo_forward.1} parent=0 // pred_check_branch
    %31 = sbr.rel (0) target = $region37
  $region36: #{bpo_forward.1} parent=0 // pred_region
    _
  $region37: #{bpo_forward.1} parent=0 // pred_fallthru
    _
  %v32 = vld [vmem:[%s0] sm:$0xff]
  %v33 = vld [vmem:[%s1] sm:$0xff]
  %v34 = vld [vmem:[%s1 + $0x8] sm:$0xff]
  %v35 = vld [vmem:[%s1 + $0x10] sm:$0xff]
  %v36 = vld [vmem:[%s1 + $0x18] sm:$0xff]
  %v37 = vld [vmem:[%s2] sm:$0x1]
  %v39 = vperm.slane %v37, 0
  %vm41 = vcmask 261120
  %v43 = vsel %vm41, %v32, 0
  %45 = vmatpush.msra.mxu0 0.0
  %46 = vmatpush.msra.mxu0 0.0
  %47 = vmatpush.msra.mxu0 0.0
  %48 = vmatpush.msra.mxu0 0.0
  %49 = vmatpush.msra.mxu0 0.0
  %50 = vmatpush.msra.mxu0 0.0
  %51 = vmatpush.msra.mxu0 0.0
  %52 = vmatpush.msra.mxu0 0.0
  %53 = vmatpush.msra.mxu0 0.0
  %54 = vmatpush.msra.mxu0 0.0
  %55 = vmatpush.msra.mxu0 0.0
  %56 = vmatpush.msra.mxu0 0.0
  %57 = vmatpush.msra.mxu0 %v36
  %58 = vmatpush.msra.mxu0 %v35
  %59 = vmatpush.msra.mxu0 %v34
  %60 = vmatpush.msra.mxu0 %v33
  %61 = vmatmul.f32.gmra.mxu0 %v43
  %v62 = vpop.f32.mrf.mxu0
  %v63 = vadd.f32 %v39, %v62
  %64 = vdwg.mxu0
  %v65 = vrot.slane %v63, 4
  %v66 = vadd.f32 %v63, %v65
  %v67 = vrot.slane %v66, 2
  %v68 = vadd.f32 %v66, %v67
  %v69 = vrot.slane %v68, 1
  %v70 = vadd.f32 %v68, %v69
  %v71 = vmul.f32 %v70, 0.125
  %v72 = vmul.f32 %v63, %v63
  %v73 = vrot.slane %v72, 4
  %v74 = vadd.f32 %v72, %v73
  %v75 = vrot.slane %v74, 2
  %v76 = vadd.f32 %v74, %v75
  %v77 = vrot.slane %v76, 1
  %v78 = vadd.f32 %v76, %v77
  %v79 = vmul.f32 %v78, 0.125
  %v80 = vmul.f32 %v71, %v71
  %v81 = vsub.f32 %v79, %v80
  %v82 = vld [vmem:[%s3] sm:$0x1]
  %v83 = vadd.f32 %v81, 1e-05
  %v84 = vrsqrt.pop %v83
  %v85 = vmul.f32 %v84, %v83
  %v86 = vmul.f32 %v85, %v84
  %v87 = vmul.f32 0.5, %v86
  %v88 = vsub.f32 1.5, %v87
  %v89 = vmul.f32 %v84, %v88
  %vm90 = vweird.f32 %v83
  %vm91 = vweird.f32 %v84
  %vm92 = vmor %vm90, %vm91
  %v93 = vsel %vm92, %v84, %v89
  %v94 = vmul.f32 %v82, %v93
  %v95 = vld [vmem:[%s4] sm:$0x1]
  %v96 = vmul.f32 %v71, %v94
  %v97 = vsub.f32 %v95, %v96
  %v99 = vperm.slane %v94, 0
  %v101 = vmul.f32 %v63, %v99
  %v103 = vperm.slane %v97, 0
  %v105 = vadd.f32 %v101, %v103
  %v106 = vmax.f32 %v105, 0.0
  %v107 = vld [vmem:[%s5] sm:$0xff]
  %v108 = vld [vmem:[%s5 + $0x8] sm:$0xff]
  %v109 = vld [vmem:[%s5 + $0x10] sm:$0xff]
  %v110 = vld [vmem:[%s5 + $0x18] sm:$0xff]
  %v111 = vld [vmem:[%s5 + $0x20] sm:$0xff]
  %v112 = vld [vmem:[%s5 + $0x28] sm:$0xff]
  %v113 = vld [vmem:[%s5 + $0x30] sm:$0xff]
  %v114 = vld [vmem:[%s5 + $0x38] sm:$0xff]
  %v115 = vld [vmem:[%s5 + $0x40] sm:$0xff]
  %v116 = vld [vmem:[%s5 + $0x48] sm:$0xff]
  %v117 = vld [vmem:[%s5 + $0x50] sm:$0xff]
  %v118 = vld [vmem:[%s5 + $0x58] sm:$0xff]
  %v119 = vld [vmem:[%s5 + $0x60] sm:$0xff]
  %v120 = vld [vmem:[%s5 + $0x68] sm:$0xff]
  %v121 = vld [vmem:[%s5 + $0x70] sm:$0xff]
  %v122 = vld [vmem:[%s5 + $0x78] sm:$0xff]
  %v123 = vld [vmem:[%s6] sm:$0x1]
  %v125 = vperm.slane %v123, 0
  %127 = vmatpush.msra.mxu0 %v122
  %128 = vmatpush.msra.mxu0 %v121
  %129 = vmatpush.msra.mxu0 %v120
  %130 = vmatpush.msra.mxu0 %v119
  %131 = vmatpush.msra.mxu0 %v118
  %132 = vmatpush.msra.mxu0 %v117
  %133 = vmatpush.msra.mxu0 %v116
  %134 = vmatpush.msra.mxu0 %v115
  %135 = vmatpush.msra.mxu0 %v114
  %136 = vmatpush.msra.mxu0 %v113
  %137 = vmatpush.msra.mxu0 %v112
  %138 = vmatpush.msra.mxu0 %v111
  %139 = vmatpush.msra.mxu0 %v110
  %140 = vmatpush.msra.mxu0 %v109
  %141 = vmatpush.msra.mxu0 %v108
  %142 = vmatpush.msra.mxu0 %v107
  %143 = vmatmul.f32.gmra.mxu0 %v106
  %v144 = vpop.f32.mrf.mxu0
  %v145 = vadd.f32 %v125, %v144
  %146 = vdwg.mxu0
  %v147 = vmax.f32 %v145, 0.0
  %v148 = vld [vmem:[%s7] sm:$0xff]
  %v149 = vld [vmem:[%s7 + $0x8] sm:$0xff]
  %v150 = vld [vmem:[%s8] sm:$0xff]
  %v151 = vld [vmem:[%s8 + $0x8] sm:$0xff]
  %153 = vset.pattern.permute.xlu0 0
  %154 = vperm.xlu0 %153, %v150
  %v155 = vpop.permute.xlu0 %154
  %158 = vset.pattern.permute.xlu0 0
  %159 = vperm.xlu0 %158, %v151
  %v160 = vpop.permute.xlu0 %159
  %vm162 = vcmask 523264
  %v164 = vsel %vm162, %v148, 0
  %v167 = vsel %vm162, %v149, 0
  %v170 = vsel %vm162, %v147, 0
  %172 = vmatpush.xpose.msra.mxu0 0.0
  %173 = vmatpush.xpose.msra.mxu0 0.0
  %174 = vmatpush.xpose.msra.mxu0 0.0
  %175 = vmatpush.xpose.msra.mxu0 0.0
  %176 = vmatpush.xpose.msra.mxu0 0.0
  %177 = vmatpush.xpose.msra.mxu0 0.0
  %178 = vmatpush.xpose.msra.mxu0 0.0
  %179 = vmatpush.xpose.msra.mxu0 0.0
  %180 = vmatpush.xpose.msra.mxu0 0.0
  %181 = vmatpush.xpose.msra.mxu0 0.0
  %182 = vmatpush.xpose.msra.mxu0 0.0
  %183 = vmatpush.xpose.msra.mxu0 0.0
  %184 = vmatpush.xpose.msra.mxu0 0.0
  %185 = vmatpush.xpose.msra.mxu0 0.0
  %186 = vmatpush.xpose.msra.mxu0 0.0
  %187 = vmatpush.xpose.msra.mxu0 %v170
  %188 = vmatmul.f32.gmra.mxu0 %v164
  %v189 = vpop.f32.mrf.mxu0
  %v190 = vadd.f32 %v155, %v189
  %191 = vmatmul.f32.gmra.mxu0 %v167
  %v192 = vpop.f32.mrf.mxu0
  %v193 = vadd.f32 %v160, %v192
  %194 = vdwg.mxu0
  %vm195 = vcmask 64512
  %196 = vst.msk [vmem:[%s9] sm:$0xff] %vm195, %v190
  %197 = vst.msk [vmem:[%s9 + $0x8] sm:$0xff] %vm195, %v193
  // Predicated region
  $region38: #{bpo_forward.1} parent=0 // pred_check
    _
  $region39: #{bpo_forward.1} parent=0 // pred_check_branch
    %199 = sbr.rel (0) target = $region41
  $region40: #{bpo_forward.1} parent=0 // pred_region
    _
  $region41: #{bpo_forward.1} parent=0 // pred_fallthru
    _
  // Predicated region
  $region42: #{bpo_forward.1} parent=0 // pred_check
    _
  $region43: #{bpo_forward.1} parent=0 // pred_check_branch
    %201 = sbr.rel (0) target = $region45
  $region44: #{bpo_forward.1} parent=0 // pred_region
    _
  $region45: #{bpo_forward.1} parent=0 // pred_fallthru
    _

</llo_original>
